<compile_context>
chip_gen: v5e
topology: v5e:2x2
jax: 0.10.0
libtpu: 0.0.40
codegen_flags: <defaults>
</compile_context>

<pallas_src>
import numpy as np
import jax
import jax.numpy as jnp
from jax.experimental import pallas as pl
from jax.experimental.pallas import tpu as pltpu

_GRAY_W = (0.299, 0.587, 0.114)  # kornia.color.rgb_to_grayscale weights


# ----------------------------------------------------------------------------- glue helpers
def _bilinear_interp_matrix(out_size: int, in_size: int) -> np.ndarray:
    """M (out_size, in_size) so that out = M @ in reproduces bilinear resize
    (align_corners=False, antialias=False) along that axis."""
    scale = in_size / out_size
    i = np.arange(out_size, dtype=np.float64)
    src = (i + 0.5) * scale - 0.5
    src = np.clip(src, 0.0, None)
    i0 = np.floor(src).astype(np.int64)
    i0 = np.minimum(i0, in_size - 1)
    i1 = np.minimum(i0 + 1, in_size - 1)
    w1 = np.clip(src - i0, 0.0, 1.0)
    w0 = 1.0 - w1
    m = np.zeros((out_size, in_size), dtype=np.float32)
    rows = np.arange(out_size)
    np.add.at(m, (rows, i0), w0.astype(np.float32))
    np.add.at(m, (rows, i1), w1.astype(np.float32))
    return m


def _crop_to_aspect_ratio_slices(ideal_aspect: float, h: int, w: int):
    """Replicates DataTransformer.crop_to_aspect_ratio index arithmetic (uint32 truncation)."""
    aspect_ratio = w / h
    if aspect_ratio > ideal_aspect:
        new_width = int(h * ideal_aspect)
        offset = (w - new_width) / 2
        resize = (0, offset, h, w - offset)
    else:
        new_height = int(w / ideal_aspect)
        offset = (h - new_height) / 2
        resize = (offset, 0, h - offset, w)
    r = np.array(resize, dtype=np.uint32)
    return int(r[0]), int(r[1]), int(r[2]), int(r[3])


def _round_up(v: int, m: int) -> int:
    return ((v + m - 1) // m) * m


def _pick_width_tile(w_pad: int) -> int:
    for tw in (1024, 512, 384, 256, 128):
        if w_pad % tw == 0:
            return tw
    return w_pad  # w_pad is always a multiple of 128, so we never get here


# ----------------------------------------------------------------------------- kernels
def _make_resize_kernel(height_first: bool):
    """Two-matmul resize kernel, tiled over the (lane-padded) output width.

    Inputs : img_flat (c_in*H_c, W_c), A (M, c_in*H_c), RWt tile (W_c, TW)
    Outputs: unnormalized out tile (M, TW), resident abs-sum accumulator (1, 1)
    """
    if height_first:
        def kernel(img_ref, a_ref, rwt_ref, o_ref, sum_ref, tmp_ref):
            j = pl.program_id(0)

            @pl.when(j == 0)
            def _init():
                # A @ img does channel-mix + height interpolation + row border in one matmul;
                # it is width-tile independent, so compute once and keep resident in scratch.
                tmp_ref[...] = jnp.dot(
                    a_ref[...], img_ref[...],
                    preferred_element_type=jnp.float32).astype(tmp_ref.dtype)
                sum_ref[...] = jnp.zeros_like(sum_ref)

            out = jnp.dot(tmp_ref[...], rwt_ref[...],
                          preferred_element_type=jnp.float32)
            o_ref[...] = out
            sum_ref[...] += jnp.sum(jnp.abs(out), keepdims=True)
    else:
        def kernel(img_ref, a_ref, rwt_ref, o_ref, sum_ref):
            j = pl.program_id(0)

            @pl.when(j == 0)
            def _init():
                sum_ref[...] = jnp.zeros_like(sum_ref)

            tmp = jnp.dot(img_ref[...], rwt_ref[...],
                          preferred_element_type=jnp.float32).astype(a_ref.dtype)
            out = jnp.dot(a_ref[...], tmp, preferred_element_type=jnp.float32)
            o_ref[...] = out
            sum_ref[...] += jnp.sum(jnp.abs(out), keepdims=True)
    return kernel


def _make_rescale_kernel(n_total: int):
    """out = in / mean(|padded image|) == in * (n_total / abs_sum); one scalar per tile."""
    def kernel(sum_ref, x_ref, o_ref):
        # NOTE: no epsilon — an all-zero input yields inf/NaN exactly like the PyTorch reference.
        scale = jnp.float32(n_total) / sum_ref[0, 0]
        o_ref[...] = x_ref[...] * scale
    return kernel


# ----------------------------------------------------------------------------- forward
def data_transformer_forward(x,
                             num_pixel_x: int,
                             grayscale: bool = True,
                             num_pixel_y: int | None = None,
                             border_x: int = 0,
                             border_y: int = 0,
                             center_x: int = 0,
                             center_y: int = 0,
                             sigma_gaussian_filter: float = 0.0,
                             compute_dtype=jnp.float32):
    # The reference __init__ has a bug (never stores the defaulted num_pixel_y); we follow
    # the obvious intent and default it to num_pixel_x.
    if num_pixel_y is None:
        num_pixel_y = num_pixel_x

    x = jnp.asarray(x)
    if x.ndim == 2:
        x = x[None]
    if x.shape[0] == 4:
        x = x[:3]
    x = x.astype(jnp.float32)
    c_in, h_in, w_in = int(x.shape[0]), int(x.shape[1]), int(x.shape[2])

    h_out = num_pixel_x - 2 * border_x          # effective output height
    w_out = num_pixel_y - 2 * border_y          # effective output width
    ideal_aspect = w_out / h_out

    # static center crop to the target aspect ratio (glue, matches reference index math)
    r0, c0, r1, c1 = _crop_to_aspect_ratio_slices(ideal_aspect, h_in, w_in)
    x_crop = x[:, r0:r1, c0:c1]
    h_c, w_c = int(x_crop.shape[-2]), int(x_crop.shape[-1])

    # channel mixing matrix (grayscale mix or identity)
    if grayscale:
        if c_in == 1:
            mix = np.eye(1, dtype=np.float32)
        elif c_in == 3:
            mix = np.asarray([_GRAY_W], dtype=np.float32)
        else:
            raise ValueError(f"grayscale=True requires 1 or 3 channels, got {c_in}")
        c_out = 1
    else:
        mix = np.eye(c_in, dtype=np.float32)
        c_out = c_in

    # A = channel-mix (x) row-border-padded height-interpolation  -> (c_out*num_pixel_x, c_in*H_c)
    rh = _bilinear_interp_matrix(h_out, h_c)
    rh_pad = np.zeros((num_pixel_x, h_c), dtype=np.float32)
    rh_pad[border_x:border_x + h_out, :] = rh
    a_mat = np.kron(mix, rh_pad)

    # RWt = width interpolation^T with column border pad + lane padding to a multiple of 128
    w_total = _round_up(num_pixel_y, 128)
    rw = _bilinear_interp_matrix(w_out, w_c)
    rwt = np.zeros((w_c, w_total), dtype=np.float32)
    rwt[:, border_y:border_y + w_out] = rw.T

    m = c_out * num_pixel_x
    k1 = c_in * h_c
    n_total = c_out * num_pixel_x * num_pixel_y     # mean(|.|) denominator (real padded image)

    # static matmul-order choice (both orders are numerically identical)
    hf_flops = m * k1 * w_c + m * w_c * w_total
    wf_flops = k1 * w_c * w_total + m * k1 * w_total
    height_first = hf_flops <= wf_flops

    tw = _pick_width_tile(w_total)
    grid = (w_total // tw,)

    img_flat = x_crop.reshape(k1, w_c).astype(compute_dtype)
    a_arr = jnp.asarray(a_mat, dtype=compute_dtype)
    rwt_arr = jnp.asarray(rwt, dtype=compute_dtype)

    scratch = [pltpu.VMEM((m, w_c), compute_dtype)] if height_first else []
    itemsize = jnp.dtype(compute_dtype).itemsize
    flops = int(2 * (hf_flops if height_first else wf_flops))
    bytes_accessed = int(itemsize * (img_flat.size + a_arr.size + rwt_arr.size)
                         + 4 * (m * w_total + 1))

    out_unnorm, abs_sum = pl.pallas_call(
        _make_resize_kernel(height_first),
        out_shape=(jax.ShapeDtypeStruct((m, w_total), jnp.float32),
                   jax.ShapeDtypeStruct((1, 1), jnp.float32)),
        grid=grid,
        in_specs=[
            pl.BlockSpec((k1, w_c), lambda j: (0, 0)),   # cropped image, resident
            pl.BlockSpec((m, k1), lambda j: (0, 0)),     # fused mix+height matrix, resident
            pl.BlockSpec((w_c, tw), lambda j: (0, j)),   # width-interp tile, pipelined
        ],
        out_specs=(
            pl.BlockSpec((m, tw), lambda j: (0, j)),     # lane-dense unnormalized output tile
            pl.BlockSpec((1, 1), lambda j: (0, 0)),      # resident abs-sum accumulator
        ),
        scratch_shapes=scratch,
        compiler_params=pltpu.CompilerParams(
            dimension_semantics=("arbitrary",),          # accumulator + resident scratch
            vmem_limit_bytes=64 * 1024 * 1024),
        cost_estimate=pl.CostEstimate(flops=flops, transcendentals=0,
                                      bytes_accessed=bytes_accessed),
    )(img_flat, a_arr, rwt_arr)

    out_flat = pl.pallas_call(
        _make_rescale_kernel(n_total),
        out_shape=jax.ShapeDtypeStruct((m, w_total), jnp.float32),
        grid=grid,
        in_specs=[
            pl.BlockSpec(memory_space=pltpu.MemorySpace.SMEM),   # (1,1) abs-sum scalar
            pl.BlockSpec((m, tw), lambda j: (0, j)),
        ],
        out_specs=pl.BlockSpec((m, tw), lambda j: (0, j)),
        input_output_aliases={1: 0},                              # rescale in place in HBM
        compiler_params=pltpu.CompilerParams(
            dimension_semantics=("parallel",),
            vmem_limit_bytes=64 * 1024 * 1024),
    )(abs_sum, out_unnorm)

    out = out_flat.reshape(c_out, num_pixel_x, w_total)[:, :, :num_pixel_y]
    return out[None, None]   # (1, 1, C_out, num_pixel_x, num_pixel_y)


# ----------------------------------------------------------------------------- pure-jnp reference
def _reference_jax(x, num_pixel_x, grayscale, num_pixel_y, border_x, border_y):
    if num_pixel_y is None:
        num_pixel_y = num_pixel_x
    x = jnp.asarray(x)
    if x.ndim == 2:
        x = x[None]
    if x.shape[0] == 4:
        x = x[:3]
    x = x.astype(jnp.float32)
    h_out = num_pixel_x - 2 * border_x
    w_out = num_pixel_y - 2 * border_y
    ideal = w_out / h_out
    r0, c0, r1, c1 = _crop_to_aspect_ratio_slices(ideal, int(x.shape[-2]), int(x.shape[-1]))
    img = x[:, r0:r1, c0:c1]
    if grayscale and img.shape[0] != 1:
        img = (_GRAY_W[0] * img[0] + _GRAY_W[1] * img[1] + _GRAY_W[2] * img[2])[None]
    rh = jnp.asarray(_bilinear_interp_matrix(h_out, int(img.shape[-2])))
    rw = jnp.asarray(_bilinear_interp_matrix(w_out, int(img.shape[-1])))
    img = jnp.einsum('oh,chw->cow', rh, img)
    img = jnp.einsum('ow,chw->cho', rw, img)
    if border_x != 0 or border_y != 0:
        img = jnp.pad(img, ((0, 0), (border_x, border_x), (border_y, border_y)))
    img = img / jnp.mean(jnp.abs(img))
    return img[None, None]


if __name__ == "__main__":
    key = jax.random.PRNGKey(0)
    key1, key2 = jax.random.split(key)

    # --- test 1: RGB -> grayscale, upscale 10x12 -> 12x12, border pad to 16x16 -------------
    #             (single width tile, height-first matmul order)
    x1 = jax.random.uniform(key1, (3, 10, 12), dtype=jnp.float32)
    out1 = data_transformer_forward(x1, num_pixel_x=16, grayscale=True,
                                    num_pixel_y=16, border_x=2, border_y=2)
    out1 = jax.block_until_ready(out1)
    ref1 = jax.block_until_ready(_reference_jax(x1, 16, True, 16, 2, 2))
    assert out1.shape == (1, 1, 1, 16, 16), out1.shape
    assert np.allclose(np.asarray(out1), np.asarray(ref1), rtol=1e-4, atol=2e-5), \
        "mismatch vs reference (test 1)"

    # --- test 2: keep RGB, downscale, wide output -> multi-tile grid, width-first order ----
    x2 = jax.random.uniform(key2, (3, 20, 800), dtype=jnp.float32)
    out2 = data_transformer_forward(x2, num_pixel_x=16, grayscale=False,
                                    num_pixel_y=640, border_x=2, border_y=0)
    out2 = jax.block_until_ready(out2)
    ref2 = jax.block_until_ready(_reference_jax(x2, 16, False, 640, 2, 0))
    assert out2.shape == (1, 1, 3, 16, 640), out2.shape
    assert np.allclose(np.asarray(out2), np.asarray(ref2), rtol=1e-4, atol=2e-5), \
        "mismatch vs reference (test 2)"

    print("KERNEL_OK")
</pallas_src>

<mosaic_0001>
module attributes {stable_mosaic.version = 11 : i64} {
  func.func @kernel(%arg0: i32, %arg1: memref<30x10xf32, #tpu.memory_space<vmem>>, %arg2: memref<16x30xf32, #tpu.memory_space<vmem>>, %arg3: memref<10x128xf32, #tpu.memory_space<vmem>>, %arg4: memref<16x128xf32, #tpu.memory_space<vmem>>, %arg5: memref<1x1xf32, #tpu.memory_space<vmem>>, %arg6: memref<16x10xf32, #tpu.memory_space<vmem>>) attributes {dimension_semantics = [#tpu.dimension_semantics<arbitrary>], iteration_bounds = array<i64: 1>, scalar_prefetch = 0 : i64, scratch_operands = 1 : i64, tpu.core_type = #tpu.core_type<tc>, window_params = [{pipeline_mode = #tpu.pipeline_mode<synchronous>, transform_indices = @transform_0, window_bounds = array<i64: 30, 10>}, {pipeline_mode = #tpu.pipeline_mode<synchronous>, transform_indices = @transform_1, window_bounds = array<i64: 16, 30>}, {transform_indices = @transform_2, window_bounds = array<i64: 10, 128>}, {transform_indices = @transform_3, window_bounds = array<i64: 16, 128>}, {pipeline_mode = #tpu.pipeline_mode<synchronous>, transform_indices = @transform_4, window_bounds = array<i64: 1, 1>}]} {
    %c0_i32 = arith.constant 0 : i32
    %0 = arith.cmpi eq, %arg0, %c0_i32 : i32
    %1 = arith.extui %0 : i1 to i32
    %c0_i32_0 = arith.constant 0 : i32
    %2 = arith.cmpi ne, %1, %c0_i32_0 : i32
    scf.if %2 {
      %c0_11 = arith.constant 0 : index
      %c0_12 = arith.constant 0 : index
      %16 = vector.load %arg2[%c0_11, %c0_12] : memref<16x30xf32, #tpu.memory_space<vmem>>, vector<16x30xf32>
      %c0_13 = arith.constant 0 : index
      %c0_14 = arith.constant 0 : index
      %17 = vector.load %arg1[%c0_13, %c0_14] : memref<30x10xf32, #tpu.memory_space<vmem>>, vector<30x10xf32>
      %cst_15 = arith.constant dense<0.000000e+00> : vector<16x10xf32>
      %18 = tpu.matmul %16, %17, %cst_15 {dimension_numbers = #tpu.dot_dimension_numbers<[1], [0], [0], [1], [0, 0, 1, 1], [], []>} : vector<16x30xf32>, vector<30x10xf32>, vector<16x10xf32> -> vector<16x10xf32>
      %c0_16 = arith.constant 0 : index
      %c0_17 = arith.constant 0 : index
      %19 = vector.load %arg6[%c0_16, %c0_17] : memref<16x10xf32, #tpu.memory_space<vmem>>, vector<16x10xf32>
      tpu.vector_store %arg6[%c0_16, %c0_17], %18 {strides = array<i32>} : memref<16x10xf32, #tpu.memory_space<vmem>>, vector<16x10xf32>,
      %cst_18 = arith.constant 0.000000e+00 : f32
      %20 = vector.broadcast %cst_18 : f32 to vector<1x1xf32>
      %c0_19 = arith.constant 0 : index
      %c0_20 = arith.constant 0 : index
      %21 = vector.load %arg5[%c0_19, %c0_20] : memref<1x1xf32, #tpu.memory_space<vmem>>, vector<1x1xf32>
      tpu.vector_store %arg5[%c0_19, %c0_20], %20 {strides = array<i32>} : memref<1x1xf32, #tpu.memory_space<vmem>>, vector<1x1xf32>,
    } else {
    }
    %c0 = arith.constant 0 : index
    %c0_1 = arith.constant 0 : index
    %3 = vector.load %arg6[%c0, %c0_1] : memref<16x10xf32, #tpu.memory_space<vmem>>, vector<16x10xf32>
    %c0_2 = arith.constant 0 : index
    %c0_3 = arith.constant 0 : index
    %4 = vector.load %arg3[%c0_2, %c0_3] : memref<10x128xf32, #tpu.memory_space<vmem>>, vector<10x128xf32>
    %cst = arith.constant dense<0.000000e+00> : vector<16x128xf32>
    %5 = tpu.matmul %3, %4, %cst {dimension_numbers = #tpu.dot_dimension_numbers<[1], [0], [0], [1], [0, 0, 1, 1], [], []>} : vector<16x10xf32>, vector<10x128xf32>, vector<16x128xf32> -> vector<16x128xf32>
    %c0_4 = arith.constant 0 : index
    %c0_5 = arith.constant 0 : index
    %6 = vector.load %arg4[%c0_4, %c0_5] : memref<16x128xf32, #tpu.memory_space<vmem>>, vector<16x128xf32>
    tpu.vector_store %arg4[%c0_4, %c0_5], %5 {strides = array<i32>} : memref<16x128xf32, #tpu.memory_space<vmem>>, vector<16x128xf32>,
    %c0_6 = arith.constant 0 : index
    %c0_7 = arith.constant 0 : index
    %7 = vector.load %arg5[%c0_6, %c0_7] : memref<1x1xf32, #tpu.memory_space<vmem>>, vector<1x1xf32>
    %8 = math.absf %5 : vector<16x128xf32>
    %9 = vector.shape_cast %8 : vector<16x128xf32> to vector<1x16x128xf32>
    %cst_8 = arith.constant dense<0.000000e+00> : vector<1xf32>
    %10 = vector.multi_reduction <add>, %9, %cst_8 [1, 2] : vector<1x16x128xf32> to vector<1xf32>
    %11 = vector.shape_cast %10 : vector<1xf32> to vector<1x1x1xf32>
    %12 = vector.extract %11[0, 0, 0] : f32 from vector<1x1x1xf32>
    %13 = vector.broadcast %12 : f32 to vector<1x1xf32>
    %14 = arith.addf %7, %13 : vector<1x1xf32>
    %c0_9 = arith.constant 0 : index
    %c0_10 = arith.constant 0 : index
    %15 = vector.load %arg5[%c0_9, %c0_10] : memref<1x1xf32, #tpu.memory_space<vmem>>, vector<1x1xf32>
    tpu.vector_store %arg5[%c0_9, %c0_10], %14 {strides = array<i32>} : memref<1x1xf32, #tpu.memory_space<vmem>>, vector<1x1xf32>,
    return
  }
  func.func @transform_0(%arg0: i32) -> (i32, i32) {
    %c0_i32 = arith.constant 0 : i32
    %c0_i32_0 = arith.constant 0 : i32
    %c0_i32_1 = arith.constant 0 : i32
    return %c0_i32, %c0_i32_0 : i32, i32
  }
  func.func @transform_1(%arg0: i32) -> (i32, i32) {
    %c0_i32 = arith.constant 0 : i32
    %c0_i32_0 = arith.constant 0 : i32
    %c0_i32_1 = arith.constant 0 : i32
    return %c0_i32, %c0_i32_0 : i32, i32
  }
  func.func @transform_2(%arg0: i32) -> (i32, i32) {
    %c0_i32 = arith.constant 0 : i32
    %c0_i32_0 = arith.constant 0 : i32
    return %c0_i32, %arg0 : i32, i32
  }
  func.func @transform_3(%arg0: i32) -> (i32, i32) {
    %c0_i32 = arith.constant 0 : i32
    %c0_i32_0 = arith.constant 0 : i32
    return %c0_i32, %arg0 : i32, i32
  }
  func.func @transform_4(%arg0: i32) -> (i32, i32) {
    %c0_i32 = arith.constant 0 : i32
    %c0_i32_0 = arith.constant 0 : i32
    %c0_i32_1 = arith.constant 0 : i32
    return %c0_i32, %c0_i32_0 : i32, i32
  }
}

</mosaic_0001>

<llo_original>
// kernel: tpu_custom_call.1
$region0: #{tpu_custom_call.1}
  #allocation0 [shape = 'u32[]', space=smem, size = 0x4, offset = 0x4, fixed_abs, tag = 'smem constant byte address 0x4 - core index']
  #allocation1 [shape = 'u32[72,128]{1,0:T(1,128)}', space=vmem, size = 0x9000, scoped, tag = 'internal scratch']
  #allocation2 [shape = 'f32[16,10]{1,0:T(8,128)}', space=vmem, size = 0x2000, scoped, tag = 'scratch operand']
  %s0 = inlined_call_operand.vmem [shape: f32[30,10], index: 0, kind: input, shape index: {}]
  %s1 = inlined_call_operand.vmem [shape: f32[16,30], index: 1, kind: input, shape index: {}]
  %s2 = inlined_call_operand.vmem [shape: f32[10,128], index: 2, kind: input, shape index: {}]
  %s3 = inlined_call_operand.hbm [shape: f32[16,128], index: 3, kind: output, shape index: {0}]
  %s4 = inlined_call_operand.hbm [shape: f32[1,1], index: 4, kind: output, shape index: {1}]
  %5 = xla_tuple %s3, %s4
  %s6 = sld [smem:[#allocation0]]
  $region34: #{tpu_custom_call.1} parent=0
    _
  %s8 = ssub.s32 1, %s6
  %s9 = scalar_select 0, %s8, %s6
  $region1: #{tpu_custom_call.1} parent=0
    #allocation3 [shape = 'u8[8192]{0}', space=vmem, size = 0x2000, scoped, tag = 'output window, operand 0, single buffered']
    #allocation4 [shape = 's32[1]{0}', space=sflag, size = 0x4, scoped, tag = 'scoped memory for tpu_custom_call.1']
    #allocation5 [shape = 'u8[512]{0}', space=vmem, size = 0x400, scoped, tag = 'output window, operand 1, single buffered']
    #allocation6 [shape = 's32[1]{0}', space=sflag, size = 0x4, scoped, tag = 'scoped memory for tpu_custom_call.1']
    %10 = vsyncpa [#allocation4], 0
    %11 = vsyncpa [#allocation6], 0
    // Predicated region
    $region2: #{tpu_custom_call.1} parent=1 // pred_check
      _
    $region3: #{tpu_custom_call.1} parent=1 // pred_check_branch
      %13 = sbr.rel (0) target = $region5
    $region4: #{tpu_custom_call.1} parent=1 // pred_region
      _
    $region5: #{tpu_custom_call.1} parent=1 // pred_fallthru
      _
    // Predicated region
    $region6: #{tpu_custom_call.1} parent=1 // pred_check
      _
    $region7: #{tpu_custom_call.1} parent=1 // pred_check_branch
      %15 = sbr.rel (0) target = $region9
    $region8: #{tpu_custom_call.1} parent=1 // pred_region
      _
    $region9: #{tpu_custom_call.1} parent=1 // pred_fallthru
      _
    // Predicated region
    $region10: #{tpu_custom_call.1} parent=1 // pred_check
      _
    $region11: #{tpu_custom_call.1} parent=1 // pred_check_branch
      %17 = sbr.rel (0) target = $region13
    $region12: #{tpu_custom_call.1} parent=1 // pred_region
      _
    $region13: #{tpu_custom_call.1} parent=1 // pred_fallthru
      _
    %p18 = scmp.eq.s32.totalorder 0, 0
    // Predicated region
    $region14: #{tpu_custom_call.1} parent=1 // pred_check
      %p19 = pneg %p18
    $region15: #{tpu_custom_call.1} parent=1 // pred_check_branch
      %21 = sbr.rel (%p19) target = $region17
    $region16: #{tpu_custom_call.1} parent=1 // pred_region
      %v22 = vld [vmem:[%s1] sm:$0xff]
      %v23 = vld [vmem:[%s1 + $0x8] sm:$0xff]
      %v24 = vld [vmem:[%s0] sm:$0xff]
      %v25 = vld [vmem:[%s0 + $0x8] sm:$0xff]
      %v26 = vld [vmem:[%s0 + $0x10] sm:$0xff]
      %v27 = vld [vmem:[%s0 + $0x18] sm:$0x3f]
      %vm28 = vcmask 244736
      %v30 = vsel %vm28, %v22, 0
      %v33 = vsel %vm28, %v23, 0
      %vm35 = vcmask 1045504
      %v37 = vsel %vm35, %v27, 0
      %39 = vmatpush.msra.mxu0 0.0
      %40 = vmatpush.msra.mxu0 0.0
      %41 = vmatpush.msra.mxu0 0.0
      %42 = vmatpush.msra.mxu0 0.0
      %43 = vmatpush.msra.mxu0 0.0
      %44 = vmatpush.msra.mxu0 0.0
      %45 = vmatpush.msra.mxu0 0.0
      %46 = vmatpush.msra.mxu0 0.0
      %47 = vmatpush.msra.mxu0 0.0
      %48 = vmatpush.msra.mxu0 0.0
      %49 = vmatpush.msra.mxu0 0.0
      %50 = vmatpush.msra.mxu0 0.0
      %51 = vmatpush.msra.mxu0 %v37
      %52 = vmatpush.msra.mxu0 %v26
      %53 = vmatpush.msra.mxu0 %v25
      %54 = vmatpush.msra.mxu0 %v24
      %55 = vmatmul.f32.gmra.mxu0 %v30
      %v56 = vpop.f32.mrf.mxu0
      %v57 = vadd.f32 0.0, %v56
      %58 = vmatmul.f32.gmra.mxu0 %v33
      %v59 = vpop.f32.mrf.mxu0
      %v60 = vadd.f32 0.0, %v59
      %61 = vdwg.mxu0
      %vm62 = vcmask 80896
      %63 = vst.msk [vmem:[#allocation2] sm:$0xff] %vm62, %v57
      %64 = vst.msk [vmem:[#allocation2 + $0x8] sm:$0xff] %vm62, %v60
      %vm65 = vcmask 0
      %66 = vst.msk [vmem:[#allocation5] sm:$0x1] %vm65, 0.0
    $region17: #{tpu_custom_call.1} parent=1 // pred_fallthru
      _
    %v67 = vld [vmem:[#allocation2] sm:$0xff]
    %v68 = vld [vmem:[#allocation2 + $0x8] sm:$0xff]
    %v69 = vld [vmem:[%s2] sm:$0xff]
    %v70 = vld [vmem:[%s2 + $0x8] sm:$0x3]
    %vm71 = vcmask 80896
    %v73 = vsel %vm71, %v67, 0
    %v76 = vsel %vm71, %v68, 0
    %vm78 = vcmask 1041408
    %v80 = vsel %vm78, %v70, 0
    %82 = vmatpush.msra.mxu0 0.0
    %83 = vmatpush.msra.mxu0 0.0
    %84 = vmatpush.msra.mxu0 0.0
    %85 = vmatpush.msra.mxu0 0.0
    %86 = vmatpush.msra.mxu0 0.0
    %87 = vmatpush.msra.mxu0 0.0
    %88 = vmatpush.msra.mxu0 0.0
    %89 = vmatpush.msra.mxu0 0.0
    %90 = vmatpush.msra.mxu0 0.0
    %91 = vmatpush.msra.mxu0 0.0
    %92 = vmatpush.msra.mxu0 0.0
    %93 = vmatpush.msra.mxu0 0.0
    %94 = vmatpush.msra.mxu0 0.0
    %95 = vmatpush.msra.mxu0 0.0
    %96 = vmatpush.msra.mxu0 %v80
    %97 = vmatpush.msra.mxu0 %v69
    %98 = vmatmul.f32.gmra.mxu0 %v73
    %v99 = vpop.f32.mrf.mxu0
    %v100 = vadd.f32 0.0, %v99
    %101 = vmatmul.f32.gmra.mxu0 %v76
    %v102 = vpop.f32.mrf.mxu0
    %v103 = vadd.f32 0.0, %v102
    %104 = vdwg.mxu0
    %105 = vst [vmem:[#allocation3] sm:$0xff] %v100
    %106 = vst [vmem:[#allocation3 + $0x8] sm:$0xff] %v103
    %v107 = vld [vmem:[#allocation5] sm:$0x1]
    %v108 = vand.u32 2147483647, %v100
    %v109 = vand.u32 2147483647, %v103
    %v110 = vadd.f32 %v108, %v109
    %111 = vadd.xlane.f32.xlu0 %v110
    %v112 = vpop.xlane.xlu0 %111
    %v113 = vrot.slane %v112, 4
    %v114 = vadd.f32 %v112, %v113
    %v115 = vrot.slane %v114, 2
    %v116 = vadd.f32 %v114, %v115
    %v117 = vrot.slane %v116, 1
    %v118 = vadd.f32 %v116, %v117
    %s119 = vtos %v118
    %v120 = vstv %s119
    %v121 = vadd.f32 %v107, %v120
    %vm122 = vcmask 0
    %123 = vst.msk [vmem:[#allocation5] sm:$0x1] %vm122, %v121
    // Predicated region
    $region18: #{tpu_custom_call.1} parent=1 // pred_check
      _
    $region19: #{tpu_custom_call.1} parent=1 // pred_check_branch
      %125 = sbr.rel (0) target = $region21
    $region20: #{tpu_custom_call.1} parent=1 // pred_region
      %127 = vsyncadd [#allocation4], 0
      %s128 = sshll.u32 [#allocation3], 4
      %s129 = int_to_ptr.vmem [resolvable:$true] %s128
      %s130 = sshll.u32 %s3, 4
      %s131 = int_to_ptr.hbm [resolvable:$true] %s130
      %136 = dma.vmem_to_hbm [thread:$0]  %s129, 256, %s131, [#allocation4], 128, 128, 8
    $region21: #{tpu_custom_call.1} parent=1 // pred_fallthru
      _
    // Predicated region
    $region22: #{tpu_custom_call.1} parent=1 // pred_check
      _
    $region23: #{tpu_custom_call.1} parent=1 // pred_check_branch
      %138 = sbr.rel (0) target = $region25
    $region24: #{tpu_custom_call.1} parent=1 // pred_region
      %140 = vsyncadd [#allocation6], 0
      %s142 = sshll.u32 [#allocation5], 4
      %s143 = int_to_ptr.vmem [resolvable:$true] %s142
      %s144 = sshll.u32 %s4, 4
      %s145 = int_to_ptr.hbm [resolvable:$true] %s144
      %147 = dma.vmem_to_hbm [thread:$0]  %s143, 16, %s145, [#allocation6]
    $region25: #{tpu_custom_call.1} parent=1 // pred_fallthru
      _
    // Predicated region
    $region26: #{tpu_custom_call.1} parent=1 // pred_check
      _
    $region27: #{tpu_custom_call.1} parent=1 // pred_check_branch
      %149 = sbr.rel (0) target = $region29
    $region28: #{tpu_custom_call.1} parent=1 // pred_region
      %151 = dma.done [#allocation4], 256
    $region29: #{tpu_custom_call.1} parent=1 // pred_fallthru
      _
    // Predicated region
    $region30: #{tpu_custom_call.1} parent=1 // pred_check
      _
    $region31: #{tpu_custom_call.1} parent=1 // pred_check_branch
      %153 = sbr.rel (0) target = $region33
    $region32: #{tpu_custom_call.1} parent=1 // pred_region
      %155 = dma.done [#allocation6], 16
    $region33: #{tpu_custom_call.1} parent=1 // pred_fallthru
      _
    %156 = vsyncpa [#allocation4], 1
    %157 = vsyncpa [#allocation6], 1

</llo_original>
